<compile_context>
chip_gen: v7x
topology: tpu7x:2x2x1
jax: 0.10.0
libtpu: 0.0.40
codegen_flags: <defaults>
</compile_context>

<pallas_src>
import jax
import jax.numpy as jnp
from jax.experimental import pallas as pl
from jax.experimental.pallas import tpu as pltpu

LANES = 128      # class dim padded to a multiple of this -> lane-dense output store
SUBLANES = 8     # f32 sublane multiple


def _round_up(v, m):
    return ((v + m - 1) // m) * m


# ------------------------------ Pallas kernel ------------------------------ #
def _res_exit_kernel(x_ref, w_ref, o_ref):
    """o = (sum_{hw} x) @ W_scaled    (avg-pool's 1/(H*W) is folded into W).

    x_ref: (TN, C, HW)  caller dtype (f32/bf16) -- one batch tile of the feature map
    w_ref: (C, NCp)     f32                     -- fc weight^T, pre-scaled, class-padded
    o_ref: (TN, NCp)
    """
    # Global average pool: spatial reduce with f32 accumulation.  The pooled
    # (TN, C) activation stays in vregs -- it never round-trips through HBM.
    # TODO(synk): if the upstream layer can emit NHWC natively, make C the lane
    # dim (avoids HW->128 lane padding of the x tile and moves the reduce to
    # the MXU); an explicit wrapper transpose of x would cost more than it saves.
    pooled = jnp.sum(x_ref[...].astype(jnp.float32), axis=-1)
    # Fully-connected layer on the MXU, default precision, f32 accumulation.
    o_ref[...] = jnp.dot(
        pooled, w_ref[...], preferred_element_type=jnp.float32
    ).astype(o_ref.dtype)


# ------------------------------ tiling choice ------------------------------ #
def _choose_tiling(n, c, hw, x_itemsize, ncp, out_itemsize):
    """Pick the batch tile TN and a matching VMEM limit.

    The kernel is HBM-bound on x, so TN is as large as a conservative VMEM
    budget allows (double-buffered x + single-buffered weight), capped at 64,
    and shrunk so batches >= 16 still produce >= 2 grid steps.
    """
    x_row_bytes = _round_up(c, SUBLANES) * _round_up(hw, LANES) * x_itemsize
    w_bytes = _round_up(c, SUBLANES) * ncp * 4        # weight kept in f32
    x_budget = max(4 << 20, (36 << 20) - w_bytes)     # total for the 2 x buffers
    tn = max(1, (x_budget // 2) // x_row_bytes)
    tn = min(tn, 64)                                  # keep vreg pressure sane
    if n >= 16:
        # guarantee >= 2 grid steps so both TensorCores get batch tiles (v7x)
        tn = min(tn, max(SUBLANES, _round_up((n + 1) // 2, SUBLANES)))
    if tn >= n:
        tn = n                                        # block == full batch dim
    else:
        tn = max(SUBLANES, (tn // SUBLANES) * SUBLANES)

    x_tile = tn * x_row_bytes
    out_tile = _round_up(tn, SUBLANES) * ncp * out_itemsize
    vmem_est = 2 * x_tile + w_bytes + 2 * out_tile + (2 << 20)
    vmem_limit = int(min(max(vmem_est, 24 << 20), 56 << 20))   # < v7x's 64 MiB
    return tn, vmem_limit


# -------------------------------- wrapper ----------------------------------- #
def res_exit_forward(x_nchw, w_fc):
    """ResExit forward: AdaptiveAvgPool2d((1,1)) -> flatten -> Linear (no bias).

    x_nchw: (N, C, H, W)   f32 or bf16 (no wrapper upcast)
    w_fc:   (n_classes, in_features)   nn.Linear weight
    returns (N, n_classes)
    """
    n, c, h, w = x_nchw.shape
    n_classes, in_features = w_fc.shape
    assert in_features == c, (in_features, c)
    hw = h * w
    out_dtype = jnp.promote_types(x_nchw.dtype, w_fc.dtype)
    x_itemsize = jnp.dtype(x_nchw.dtype).itemsize
    out_itemsize = jnp.dtype(out_dtype).itemsize

    # One-time weight prep (tiny, off the hot path): fold the 1/(H*W) pool
    # scale into the fc weight; zero-pad the class dim to a lane-dense width.
    ncp = _round_up(n_classes, LANES)
    wt = jnp.transpose(w_fc, (1, 0)).astype(jnp.float32) / float(hw)   # (C, n_classes)
    wt = jnp.pad(wt, ((0, 0), (0, ncp - n_classes)))                   # (C, NCp)

    # x: reshape only (free); no pad, no cast -> no extra HBM round trip.
    x3 = x_nchw.reshape(n, c, hw)

    tn, vmem_limit = _choose_tiling(n, c, hw, x_itemsize, ncp, out_itemsize)
    grid = (pl.cdiv(n, tn),)

    cost = pl.CostEstimate(
        flops=2 * n * c * hw + 2 * n * c * ncp,
        transcendentals=0,
        bytes_accessed=n * c * hw * x_itemsize + c * ncp * 4 + n * ncp * out_itemsize,
    )

    out = pl.pallas_call(
        _res_exit_kernel,
        out_shape=jax.ShapeDtypeStruct((n, ncp), out_dtype),
        grid=grid,
        in_specs=[
            # streamed batch tile of the feature map (double-buffered)
            pl.BlockSpec((tn, c, hw), lambda i: (i, 0, 0)),
            # grid-invariant fc weight: single-buffered (pure VMEM headroom)
            pl.BlockSpec((c, ncp), lambda i: (0, 0), pipeline_mode=pl.Buffered(1)),
        ],
        out_specs=pl.BlockSpec((tn, ncp), lambda i: (i, 0)),
        compiler_params=pltpu.CompilerParams(
            dimension_semantics=("parallel",),
            vmem_limit_bytes=vmem_limit,
        ),
        cost_estimate=cost,
    )(x3, wt)
    return out[:, :n_classes]


# ---------------------------------- main ------------------------------------ #
if __name__ == "__main__":
    key = jax.random.PRNGKey(0)
    kx, kw = jax.random.split(key)

    N, C, H, W = 2, 32, 16, 16      # x: (N, in_features, H, W)
    N_CLASSES = 10

    x = jax.random.normal(kx, (N, C, H, W), jnp.float32)
    # nn.Linear(in_features, n_classes, bias=False) weight: (n_classes, in_features)
    bound = 1.0 / (C ** 0.5)
    w_fc = jax.random.uniform(kw, (N_CLASSES, C), jnp.float32, -bound, bound)

    out = jax.jit(res_exit_forward)(x, w_fc)
    out = jax.block_until_ready(out)

    # Pure-JAX reference: adaptive avg-pool to 1x1, flatten, linear (no bias).
    ref = jnp.mean(x, axis=(2, 3)) @ w_fc.T

    assert out.shape == (N, N_CLASSES), (out.shape, (N, N_CLASSES))
    assert bool(jnp.all(jnp.isfinite(out)))
    max_err = float(jnp.max(jnp.abs(out - ref)))
    # default-precision MXU matmul (f32 accumulation): keep a small margin
    assert max_err < 2e-3, max_err
    print("KERNEL_OK")
</pallas_src>

<mosaic_0001>
module attributes {stable_mosaic.version = 11 : i64} {
  func.func @_res_exit_kernel(%arg0: i32, %arg1: memref<2x32x256xf32, #tpu.memory_space<vmem>>, %arg2: memref<32x128xf32, #tpu.memory_space<vmem>>, %arg3: memref<2x128xf32, #tpu.memory_space<vmem>>) attributes {dimension_semantics = [#tpu.dimension_semantics<parallel>], iteration_bounds = array<i64: 1>, scalar_prefetch = 0 : i64, scratch_operands = 0 : i64, tpu.core_type = #tpu.core_type<tc>, window_params = [{transform_indices = @transform_0, window_bounds = array<i64: 2, 32, 256>}, {pipeline_mode = #tpu.pipeline_mode<synchronous>, transform_indices = @transform_1, window_bounds = array<i64: 32, 128>}, {transform_indices = @transform_2, window_bounds = array<i64: 2, 128>}]} {
    %c0 = arith.constant 0 : index
    %c0_0 = arith.constant 0 : index
    %c0_1 = arith.constant 0 : index
    %0 = vector.load %arg1[%c0, %c0_0, %c0_1] : memref<2x32x256xf32, #tpu.memory_space<vmem>>, vector<2x32x256xf32>
    %cst = arith.constant dense<0.000000e+00> : vector<2x32xf32>
    %1 = vector.multi_reduction <add>, %0, %cst [2] : vector<2x32x256xf32> to vector<2x32xf32>
    %c0_2 = arith.constant 0 : index
    %c0_3 = arith.constant 0 : index
    %2 = vector.load %arg2[%c0_2, %c0_3] : memref<32x128xf32, #tpu.memory_space<vmem>>, vector<32x128xf32>
    %cst_4 = arith.constant dense<0.000000e+00> : vector<2x128xf32>
    %3 = tpu.matmul %1, %2, %cst_4 {dimension_numbers = #tpu.dot_dimension_numbers<[1], [0], [0], [1], [0, 0, 1, 1], [], []>} : vector<2x32xf32>, vector<32x128xf32>, vector<2x128xf32> -> vector<2x128xf32>
    %c0_5 = arith.constant 0 : index
    %c0_6 = arith.constant 0 : index
    %4 = vector.load %arg3[%c0_5, %c0_6] : memref<2x128xf32, #tpu.memory_space<vmem>>, vector<2x128xf32>
    tpu.vector_store %arg3[%c0_5, %c0_6], %3 {strides = array<i32>} : memref<2x128xf32, #tpu.memory_space<vmem>>, vector<2x128xf32>,
    return
  }
  func.func @transform_0(%arg0: i32) -> (i32, i32, i32) {
    %c0_i32 = arith.constant 0 : i32
    %c0_i32_0 = arith.constant 0 : i32
    %c0_i32_1 = arith.constant 0 : i32
    return %arg0, %c0_i32, %c0_i32_0 : i32, i32, i32
  }
  func.func @transform_1(%arg0: i32) -> (i32, i32) {
    %c0_i32 = arith.constant 0 : i32
    %c0_i32_0 = arith.constant 0 : i32
    %c0_i32_1 = arith.constant 0 : i32
    return %c0_i32, %c0_i32_0 : i32, i32
  }
  func.func @transform_2(%arg0: i32) -> (i32, i32) {
    %c0_i32 = arith.constant 0 : i32
    %c0_i32_0 = arith.constant 0 : i32
    return %arg0, %c0_i32 : i32, i32
  }
}

</mosaic_0001>

<llo_original>
// kernel: res_exit_forward.1
$region0: #{res_exit_forward.1}
  #allocation0 [shape = 'u32[]', space=smem, size = 0x4, offset = 0x4, fixed_abs, tag = 'smem constant byte address 0x4 - core index']
  #allocation1 [shape = 'u32[144,128]{1,0:T(1,128)}', space=vmem, size = 0x12000, scoped, tag = 'internal scratch']
  %s0 = inlined_call_operand.vmem [shape: f32[2,32,256], index: 0, kind: input, shape index: {}]
  %s1 = inlined_call_operand.vmem [shape: f32[32,128], index: 1, kind: input, shape index: {}]
  %s2 = inlined_call_operand.hbm [shape: f32[2,128], index: 2, kind: output, shape index: {}]
  %s3 = sld [smem:[#allocation0]]
  $region18: #{res_exit_forward.1} parent=0
    _
  %s5 = ssub.s32 1, %s3
  %s6 = scalar_select 0, %s5, %s3
  $region1: #{res_exit_forward.1} parent=0
    #allocation2 [shape = 'u8[1024]{0}', space=vmem, size = 0x400, scoped, tag = 'output window, operand 0, single buffered']
    #allocation3 [shape = 's32[1]{0}', space=sflag, size = 0x4, scoped, tag = 'scoped memory for res_exit_forward.1']
    %7 = vsyncpa [#allocation3], 0
    // Predicated region
    $region2: #{res_exit_forward.1} parent=1 // pred_check
      _
    $region3: #{res_exit_forward.1} parent=1 // pred_check_branch
      %9 = sbr.rel (0) target = $region5
    $region4: #{res_exit_forward.1} parent=1 // pred_region
      _
    $region5: #{res_exit_forward.1} parent=1 // pred_fallthru
      _
    // Predicated region
    $region6: #{res_exit_forward.1} parent=1 // pred_check
      _
    $region7: #{res_exit_forward.1} parent=1 // pred_check_branch
      %11 = sbr.rel (0) target = $region9
    $region8: #{res_exit_forward.1} parent=1 // pred_region
      _
    $region9: #{res_exit_forward.1} parent=1 // pred_fallthru
      _
    %v12 = vld [vmem:[%s0] sm:$0xff]
    %v13 = vld [vmem:[%s0 + $0x8] sm:$0xff]
    %v14 = vld [vmem:[%s0 + $0x10] sm:$0xff]
    %v15 = vld [vmem:[%s0 + $0x18] sm:$0xff]
    %v16 = vld [vmem:[%s0 + $0x20] sm:$0xff]
    %v17 = vld [vmem:[%s0 + $0x28] sm:$0xff]
    %v18 = vld [vmem:[%s0 + $0x30] sm:$0xff]
    %v19 = vld [vmem:[%s0 + $0x38] sm:$0xff]
    %v20 = vld [vmem:[%s0 + $0x40] sm:$0xff]
    %v21 = vld [vmem:[%s0 + $0x48] sm:$0xff]
    %v22 = vld [vmem:[%s0 + $0x50] sm:$0xff]
    %v23 = vld [vmem:[%s0 + $0x58] sm:$0xff]
    %v24 = vld [vmem:[%s0 + $0x60] sm:$0xff]
    %v25 = vld [vmem:[%s0 + $0x68] sm:$0xff]
    %v26 = vld [vmem:[%s0 + $0x70] sm:$0xff]
    %v27 = vld [vmem:[%s0 + $0x78] sm:$0xff]
    %v28 = vadd.f32 %v12, %v13
    %29 = vadd.xlane.f32.xlu0 %v28
    %v30 = vpop.xlane.xlu0 %29
    %v31 = vadd.f32 %v14, %v15
    %32 = vadd.xlane.f32.xlu0 %v31
    %v33 = vpop.xlane.xlu0 %32
    %v34 = vadd.f32 %v16, %v17
    %35 = vadd.xlane.f32.xlu0 %v34
    %v36 = vpop.xlane.xlu0 %35
    %v37 = vadd.f32 %v18, %v19
    %38 = vadd.xlane.f32.xlu0 %v37
    %v39 = vpop.xlane.xlu0 %38
    %v40 = vadd.f32 %v20, %v21
    %41 = vadd.xlane.f32.xlu0 %v40
    %v42 = vpop.xlane.xlu0 %41
    %v43 = vadd.f32 %v22, %v23
    %44 = vadd.xlane.f32.xlu0 %v43
    %v45 = vpop.xlane.xlu0 %44
    %v46 = vadd.f32 %v24, %v25
    %47 = vadd.xlane.f32.xlu0 %v46
    %v48 = vpop.xlane.xlu0 %47
    %v49 = vadd.f32 %v26, %v27
    %50 = vadd.xlane.f32.xlu0 %v49
    %v51 = vpop.xlane.xlu0 %50
    %v52 = vld [vmem:[%s1] sm:$0xff]
    %v53 = vld [vmem:[%s1 + $0x8] sm:$0xff]
    %v54 = vld [vmem:[%s1 + $0x10] sm:$0xff]
    %v55 = vld [vmem:[%s1 + $0x18] sm:$0xff]
    %v64 = vlaneseq
    %v65 = vand.u32 %v64, 127
    %v66 = vlaneseq
    %v67 = vshrl.u32 %v66, 7
    %v68 = vsub.s32 %v65, %v67
    %v69 = vrot.slane %v30, %v68
    %v70 = vadd.s32 %v65, 4294967288
    %v71 = vlaneseq
    %v72 = vshrl.u32 %v71, 7
    %v73 = vsub.s32 %v70, %v72
    %v74 = vrot.slane %v33, %v73
    %vm75 = vcmask 130112
    %v76 = vsel %vm75, %v74, %v69
    %v77 = vadd.s32 %v65, 4294967280
    %v78 = vlaneseq
    %v79 = vshrl.u32 %v78, 7
    %v80 = vsub.s32 %v77, %v79
    %v81 = vrot.slane %v36, %v80
    %vm82 = vcmask 195712
    %v83 = vsel %vm82, %v81, %v76
    %v84 = vadd.s32 %v65, 4294967272
    %v85 = vlaneseq
    %v86 = vshrl.u32 %v85, 7
    %v87 = vsub.s32 %v84, %v86
    %v88 = vrot.slane %v39, %v87
    %vm89 = vcmask 261312
    %v90 = vsel %vm89, %v88, %v83
    %v91 = vlaneseq
    %v92 = vshrl.u32 %v91, 7
    %v93 = vsub.s32 %v65, %v92
    %v94 = vrot.slane %v42, %v93
    %v95 = vlaneseq
    %v96 = vshrl.u32 %v95, 7
    %v97 = vsub.s32 %v70, %v96
    %v98 = vrot.slane %v45, %v97
    %v99 = vsel %vm75, %v98, %v94
    %v100 = vlaneseq
    %v101 = vshrl.u32 %v100, 7
    %v102 = vsub.s32 %v77, %v101
    %v103 = vrot.slane %v48, %v102
    %v104 = vsel %vm82, %v103, %v99
    %v105 = vlaneseq
    %v106 = vshrl.u32 %v105, 7
    %v107 = vsub.s32 %v84, %v106
    %v108 = vrot.slane %v51, %v107
    %v109 = vsel %vm89, %v108, %v104
    %vm110 = vcmask 1041409
    %v111 = vsel %vm110, %v109, %v90
    %vm112 = vcmask 261120
    %v113 = vsel %vm112, %v111, 0
    %115 = vmatprep.subr.mxu0 0.0
    %116 = vmatpush1.msra.mxu0 %v52
    %117 = vmatprep.subr.mxu0 0.0
    %118 = vmatpush1.msra.mxu0 %v53
    %119 = vmatprep.subr.mxu0 0.0
    %120 = vmatpush1.msra.mxu0 %v54
    %121 = vmatprep.subr.mxu0 0.0
    %122 = vmatpush1.msra.mxu0 %v55
    %123 = vmatprep.subr.mxu0 0.0
    %124 = vmatpush1.msra.mxu0 0.0
    %125 = vmatprep.subr.mxu0 0.0
    %126 = vmatpush1.msra.mxu0 0.0
    %127 = vmatprep.subr.mxu0 0.0
    %128 = vmatpush1.msra.mxu0 0.0
    %129 = vmatprep.subr.mxu0 0.0
    %130 = vmatpush1.msra.mxu0 0.0
    %131 = vmatprep.subr.mxu0 0.0
    %132 = vmatpush1.msra.mxu0 0.0
    %133 = vmatprep.subr.mxu0 0.0
    %134 = vmatpush1.msra.mxu0 0.0
    %135 = vmatprep.subr.mxu0 0.0
    %136 = vmatpush1.msra.mxu0 0.0
    %137 = vmatprep.subr.mxu0 0.0
    %138 = vmatpush1.msra.mxu0 0.0
    %139 = vmatprep.subr.mxu0 0.0
    %140 = vmatpush1.msra.mxu0 0.0
    %141 = vmatprep.subr.mxu0 0.0
    %142 = vmatpush1.msra.mxu0 0.0
    %143 = vmatprep.subr.mxu0 0.0
    %144 = vmatpush1.msra.mxu0 0.0
    %145 = vmatprep.subr.mxu0 0.0
    %146 = vmatpush1.msra.mxu0 0.0
    %147 = vmatprep.subr.mxu0 0.0
    %148 = vmatpush1.msra.mxu0 0.0
    %149 = vmatprep.subr.mxu0 0.0
    %150 = vmatpush1.msra.mxu0 0.0
    %151 = vmatprep.subr.mxu0 0.0
    %152 = vmatpush1.msra.mxu0 0.0
    %153 = vmatprep.subr.mxu0 0.0
    %154 = vmatpush1.msra.mxu0 0.0
    %155 = vmatprep.subr.mxu0 0.0
    %156 = vmatpush1.msra.mxu0 0.0
    %157 = vmatprep.subr.mxu0 0.0
    %158 = vmatpush1.msra.mxu0 0.0
    %159 = vmatprep.subr.mxu0 0.0
    %160 = vmatpush1.msra.mxu0 0.0
    %161 = vmatprep.subr.mxu0 0.0
    %162 = vmatpush1.msra.mxu0 0.0
    %163 = vmatprep.subr.mxu0 0.0
    %164 = vmatpush1.msra.mxu0 0.0
    %165 = vmatprep.subr.mxu0 0.0
    %166 = vmatpush1.msra.mxu0 0.0
    %167 = vmatprep.subr.mxu0 0.0
    %168 = vmatpush1.msra.mxu0 0.0
    %169 = vmatprep.subr.mxu0 0.0
    %170 = vmatpush1.msra.mxu0 0.0
    %171 = vmatprep.subr.mxu0 0.0
    %172 = vmatpush1.msra.mxu0 0.0
    %173 = vmatprep.subr.mxu0 0.0
    %174 = vmatpush1.msra.mxu0 0.0
    %175 = vmatprep.subr.mxu0 0.0
    %176 = vmatpush1.msra.mxu0 0.0
    %177 = vmatprep.subr.mxu0 0.0
    %178 = vmatpush1.msra.mxu0 0.0
    %179 = vmatprep.mubr.f32.mxu0 0.0
    %180 = vmatmul.mubr.f32.gmra.mrb[0].mxu0 %v113
    %v181 = vpop.f32.mrb[0].mxu0
    %v182 = vadd.f32 0.0, %v181
    %v183 = vpop.f32.mrb[0].mxu0
    %184 = vdwg.mxu0
    %185 = vst [vmem:[#allocation2] sm:$0x3] %v182
    // Predicated region
    $region10: #{res_exit_forward.1} parent=1 // pred_check
      _
    $region11: #{res_exit_forward.1} parent=1 // pred_check_branch
      %187 = sbr.rel (0) target = $region13
    $region12: #{res_exit_forward.1} parent=1 // pred_region
      %s189 = ssub.s32 32, 32
      %190 = vsyncadd [#allocation3], %s189
      %s192 = sshll.u32 [#allocation2], 4
      %s193 = int_to_ptr.vmem [resolvable:$true] %s192
      %195 = dma.vmem_to_hbm [thread:$0]  %s193, 32, %s2, [#allocation3]
    $region13: #{res_exit_forward.1} parent=1 // pred_fallthru
      _
    // Predicated region
    $region14: #{res_exit_forward.1} parent=1 // pred_check
      _
    $region15: #{res_exit_forward.1} parent=1 // pred_check_branch
      %197 = sbr.rel (0) target = $region17
    $region16: #{res_exit_forward.1} parent=1 // pred_region
      %198 = dma.done [#allocation3], 32
    $region17: #{res_exit_forward.1} parent=1 // pred_fallthru
      _
    %199 = vsyncpa [#allocation3], 1

</llo_original>
